<compile_context>
chip_gen: v5e
topology: v5e:2x2
jax: 0.10.0
libtpu: 0.0.40
codegen_flags: <defaults>
</compile_context>

<pallas_src>
import functools

import numpy as np
import jax
import jax.numpy as jnp
from jax.experimental import pallas as pl
from jax.experimental.pallas import tpu as pltpu


def _sum11(a2d):
    """Full reduction of a rank-2 array to shape (1, 1) (stays rank-2)."""
    return jnp.sum(jnp.sum(a2d, axis=1, keepdims=True), axis=0, keepdims=True)


def _superloss_kernel(imgs_ref, w1_ref, b1_ref, w2_ref, b2_ref, kt_ref,
                      out_ref, maps_ref, *, n, f1n, f2n, n_valid, c1, c2):
    """One grid step == one batch tile (BT elements).

    imgs_ref: (2*n, HW) with rows [x-rows (n = BT*C), y-rows (n)].
    Emits raw partial sums in lanes 0..3 of a (1, 1, 128) row:
       [sum((y-x)^2), sum(ssim_map), sum(df1^2), sum(df2^2)].
    """
    f32 = jnp.float32
    imgs = imgs_ref[...]                                 # (2n, HW)
    x = imgs[:n]                                         # ground truth  (n, HW)
    y = imgs[n:]                                         # reconstruction (n, HW)

    # ---------------- MSE ----------------
    d = x - y
    mse_sum = _sum11(d * d)                              # wrapper: / (B*C*H*W)

    # ---------------- SSIM ----------------
    # Fill the (4n, HW) maps slab [x, y, x*x+y*y, x*y] and blur everything for
    # this whole batch tile with ONE matmul against the (lane-padded) Kron blur.
    maps_ref[0:2 * n, :] = imgs
    maps_ref[2 * n:3 * n, :] = x * x + y * y
    maps_ref[3 * n:4 * n, :] = x * y
    blurred = jnp.dot(maps_ref[...], kt_ref[...],
                      preferred_element_type=f32)        # (4n, Npad)
    mu_x = blurred[0:n]
    mu_y = blurred[n:2 * n]
    s_sum = blurred[2 * n:3 * n] - mu_x * mu_x - mu_y * mu_y   # sxx + syy
    sxy = blurred[3 * n:4 * n] - mu_x * mu_y
    num = (2.0 * mu_x * mu_y + c1) * (2.0 * sxy + c2)
    den = (mu_x * mu_x + mu_y * mu_y + c1) * (s_sum + c2)
    # EUP approximate reciprocal (off the VPU slot) + 2 Newton steps -> ~f32 exact.
    r = pl.reciprocal(den, approx=True)
    r = r * (2.0 - den * r)
    r = r * (2.0 - den * r)
    # Mask the zero-padded lanes (they would otherwise contribute ratio ~= 1).
    lane = jax.lax.broadcasted_iota(jnp.int32, num.shape, 1)
    ssim_sum = _sum11(jnp.where(lane < n_valid, num * r, 0.0))
    # wrapper: 1 - sum / (B*C*Ho*Wo)

    # -------- "FID" perceptual loss (InceptionV3 stand-in, 1x1-conv stages) -----
    # Block-diagonal weights fuse x and y (and all BT batch elements) of the tile
    # into a single matmul per stage.
    h1 = jnp.maximum(
        jnp.dot(w1_ref[...], imgs, preferred_element_type=f32) + b1_ref[...], 0.0)
    h2 = jnp.maximum(
        jnp.dot(w2_ref[...], h1, preferred_element_type=f32) + b2_ref[...], 0.0)
    d1 = h1[:f1n] - h1[f1n:]                             # (BT*F1, HW)
    d2 = h2[:f2n] - h2[f2n:]                             # (BT*F2, HW)
    fid1_sum = _sum11(d1 * d1)                           # wrapper: / (B*H*W*F1)
    fid2_sum = _sum11(d2 * d2)                           # wrapper: / (B*H*W*F2)

    # -------- single lane-dense (1, 128) partial-sum row for this tile --------
    lane128 = jax.lax.broadcasted_iota(jnp.int32, (1, 128), 1)
    row = (jnp.where(lane128 == 0, mse_sum, 0.0)
           + jnp.where(lane128 == 1, ssim_sum, 0.0)
           + jnp.where(lane128 == 2, fid1_sum, 0.0)
           + jnp.where(lane128 == 3, fid2_sum, 0.0))
    out_ref[0] = row.astype(f32)


def _gaussian_band(size, win, sigma):
    """(size-win+1, size) band matrix so that M @ x == 'valid' 1D Gaussian conv."""
    coords = np.arange(win, dtype=np.float64) - (win - 1) / 2.0
    g = np.exp(-(coords ** 2) / (2.0 * sigma ** 2))
    g /= g.sum()
    out = size - win + 1
    m = np.zeros((out, size), np.float32)
    for i in range(out):
        m[i, i:i + win] = g
    return m


def _pick_num_batch_tiles(B):
    """1 tile on single-TC chips (v5e/v6e); 2 tiles (one per TensorCore) on v7x."""
    try:
        kind = jax.devices()[0].device_kind.lower()
    except Exception:
        kind = ""
    if B % 2 == 0 and ("v7" in kind or "tpu7" in kind):
        return 2
    return 1


def super_loss(x_gt, x_restored, means, logvars, params,
               k_mse=1.0, k_fid=1.0, k_kl=1.0, k_ssim=1.0,
               ssim_win=11, ssim_sigma=1.5, data_range=1.0,
               num_batch_tiles=None):
    B, C, H, W = x_gt.shape
    w1, b1, w2, b2 = params["w1"], params["b1"], params["w2"], params["b2"]
    F1, F2 = w1.shape[1], w2.shape[1]
    Ho, Wo = H - ssim_win + 1, W - ssim_win + 1
    HW, HoWo = H * W, Ho * Wo

    T = _pick_num_batch_tiles(B) if num_batch_tiles is None else num_batch_tiles
    if B % T != 0:
        T = 1
    BT = B // T                     # batch elements per grid step
    n = BT * C                      # image rows per set per tile
    f1n, f2n = BT * F1, BT * F2

    f32 = jnp.float32
    # Single image input stream: per tile, x-rows then y-rows (sublane-stacked),
    # lane axis = dense H*W (free reshape).
    xg = x_gt.reshape(T, BT, C, HW).astype(f32)
    xr = x_restored.reshape(T, BT, C, HW).astype(f32)
    imgs = jnp.stack([xg, xr], axis=1).reshape(T * 2 * n, HW)       # (T*2n, HW)

    # Block-diagonal weights kron(I_{2*BT}, W^T): one matmul per FID stage covers
    # both image sets and all BT elements of the tile.  Built once in the wrapper.
    eye = jnp.eye(2 * BT, dtype=f32)
    w1bd = jnp.kron(eye, jnp.asarray(w1, f32).T)                    # (2BT*F1, 2BT*C)
    b1bd = jnp.tile(jnp.asarray(b1, f32).reshape(F1, 1), (2 * BT, 1))
    w2bd = jnp.kron(eye, jnp.asarray(w2, f32).T)                    # (2BT*F2, 2BT*F1)
    b2bd = jnp.tile(jnp.asarray(b2, f32).reshape(F2, 1), (2 * BT, 1))

    # Separable Gaussian blur folded into one Kronecker operator, zero-padded to a
    # lane-dense column count:  vec_rowmajor(G_h @ I @ G_w^T) = kron(G_h,G_w) vec(I).
    Gh = _gaussian_band(H, ssim_win, ssim_sigma)                    # (Ho, H)
    Gw = _gaussian_band(W, ssim_win, ssim_sigma)                    # (Wo, W)
    Npad = max(128, ((HoWo + 127) // 128) * 128)
    kt_np = np.zeros((HW, Npad), np.float32)
    kt_np[:, :HoWo] = np.kron(Gh, Gw).T
    Kt = jnp.asarray(kt_np)                                         # (HW, Npad)

    c1 = float((0.01 * data_range) ** 2)
    c2 = float((0.03 * data_range) ** 2)

    kernel = functools.partial(_superloss_kernel, n=n, f1n=f1n, f2n=f2n,
                               n_valid=HoWo, c1=c1, c2=c2)

    parts = pl.pallas_call(
        kernel,
        grid=(T,),
        out_shape=jax.ShapeDtypeStruct((T, 1, 128), f32),
        in_specs=[
            pl.BlockSpec((2 * n, HW), lambda t: (t, 0)),            # x||y image slab
            pl.BlockSpec((2 * BT * F1, 2 * BT * C), lambda t: (0, 0)),   # w1 blockdiag
            pl.BlockSpec((2 * BT * F1, 1), lambda t: (0, 0)),            # b1 tiled
            pl.BlockSpec((2 * BT * F2, 2 * BT * F1), lambda t: (0, 0)),  # w2 blockdiag
            pl.BlockSpec((2 * BT * F2, 1), lambda t: (0, 0)),            # b2 tiled
            pl.BlockSpec((HW, Npad), lambda t: (0, 0)),                  # blur operator
        ],
        out_specs=pl.BlockSpec((1, 1, 128), lambda t: (t, 0, 0)),
        scratch_shapes=[pltpu.VMEM((4 * n, HW), jnp.float32)],      # SSIM maps slab
        compiler_params=pltpu.CompilerParams(
            dimension_semantics=("parallel",),      # 2-TC split on v7x
            vmem_limit_bytes=32 * 1024 * 1024),
    )(imgs, w1bd, b1bd, w2bd, b2bd, Kt)

    # Tiny final reduction / normalization in the wrapper; KL is pure JAX.
    sums = jnp.sum(parts[:, 0, :], axis=0)                          # (128,)
    mse = sums[0] / float(B * C * H * W)
    ssim_loss = 1.0 - sums[1] / float(B * C * Ho * Wo)
    fid = 0.5 * (sums[2] / float(B * H * W * F1) + sums[3] / float(B * H * W * F2))
    kl = jnp.mean(jnp.sum(
        0.5 * (jnp.exp(logvars.astype(f32)) + means.astype(f32) ** 2
               - logvars.astype(f32)), axis=-1))
    loss = k_mse * mse + k_fid * fid + k_kl * kl + k_ssim * ssim_loss
    return {"loss": loss, "kl-loss": kl, "fid-loss": fid,
            "mse-loss": mse, "ssim-loss": ssim_loss}


def _super_loss_ref(x_gt, x_restored, means, logvars, params,
                    k_mse, k_fid, k_kl, k_ssim, ssim_win=11, ssim_sigma=1.5,
                    data_range=1.0):
    """Pure-JAX reference with identical semantics (for validation)."""
    hp = jax.lax.Precision.HIGHEST
    B, C, H, W = x_gt.shape
    mse = jnp.mean((x_restored - x_gt) ** 2)
    kl = jnp.mean(jnp.sum(0.5 * (jnp.exp(logvars) + means ** 2 - logvars), axis=-1))

    def flat(x):
        return jnp.transpose(x, (0, 2, 3, 1)).reshape(-1, C)

    def feats(xf):
        h1 = jnp.maximum(jnp.dot(xf, params["w1"], precision=hp) + params["b1"], 0.0)
        h2 = jnp.maximum(jnp.dot(h1, params["w2"], precision=hp) + params["b2"], 0.0)
        return h1, h2

    f1g, f2g = feats(flat(x_gt))
    f1r, f2r = feats(flat(x_restored))
    fid = 0.5 * (jnp.mean((f1g - f1r) ** 2) + jnp.mean((f2g - f2r) ** 2))

    G = jnp.asarray(_gaussian_band(H, ssim_win, ssim_sigma))
    Gt = jnp.asarray(_gaussian_band(W, ssim_win, ssim_sigma)).T
    c1 = (0.01 * data_range) ** 2
    c2 = (0.03 * data_range) ** 2

    def blur(imgs):  # (N, H, W) -> (N, Ho, Wo)
        a = jnp.einsum("oh,nhw->now", G, imgs, precision=hp)
        return jnp.einsum("now,wp->nop", a, Gt, precision=hp)

    xg = x_gt.reshape(B * C, H, W)
    xr = x_restored.reshape(B * C, H, W)
    mux, muy = blur(xg), blur(xr)
    sxx = blur(xg * xg) - mux * mux
    syy = blur(xr * xr) - muy * muy
    sxy = blur(xg * xr) - mux * muy
    ssim_map = ((2 * mux * muy + c1) * (2 * sxy + c2)) / (
        (mux * mux + muy * muy + c1) * (sxx + syy + c2))
    ssim_loss = 1.0 - jnp.mean(ssim_map)
    loss = k_mse * mse + k_fid * fid + k_kl * kl + k_ssim * ssim_loss
    return {"loss": loss, "kl-loss": kl, "fid-loss": fid,
            "mse-loss": mse, "ssim-loss": ssim_loss}


if __name__ == "__main__":
    B, C, H, W, Z = 2, 4, 16, 16, 32
    F1, F2 = 8, 16

    key = jax.random.PRNGKey(0)
    k1, k2, k3, k4, k5, k6, k7, k8 = jax.random.split(key, 8)

    x_gt = jax.random.uniform(k1, (B, C, H, W), jnp.float32)
    x_restored = jnp.clip(
        x_gt + 0.05 * jax.random.normal(k2, (B, C, H, W), jnp.float32), 0.0, 1.0)
    means = 0.1 * jax.random.normal(k3, (B, Z), jnp.float32)
    logvars = 0.1 * jax.random.normal(k4, (B, Z), jnp.float32)

    # Deterministic synthetic weights for the InceptionV3 stand-in.
    params = {
        "w1": 0.3 * jax.random.normal(k5, (C, F1), jnp.float32),
        "b1": 0.05 * jax.random.normal(k6, (1, F1), jnp.float32),
        "w2": 0.3 * jax.random.normal(k7, (F1, F2), jnp.float32),
        "b2": 0.05 * jax.random.normal(k8, (1, F2), jnp.float32),
    }

    out = super_loss(x_gt, x_restored, means, logvars, params,
                     k_mse=1.0, k_fid=1.0, k_kl=1.0, k_ssim=1.0)
    out = jax.block_until_ready(out)

    ref = jax.block_until_ready(
        _super_loss_ref(x_gt, x_restored, means, logvars, params,
                        1.0, 1.0, 1.0, 1.0))

    for name in ("loss", "kl-loss", "fid-loss", "mse-loss", "ssim-loss"):
        np.testing.assert_allclose(np.asarray(out[name]), np.asarray(ref[name]),
                                   rtol=1e-3, atol=1e-5)

    print("KERNEL_OK")
</pallas_src>

<mosaic_0001>
module attributes {stable_mosaic.version = 11 : i64} {
  func.func @_superloss_kernel(%arg0: i32, %arg1: memref<16x256xf32, #tpu.memory_space<vmem>>, %arg2: memref<32x16xf32, #tpu.memory_space<vmem>>, %arg3: memref<32x1xf32, #tpu.memory_space<vmem>>, %arg4: memref<64x32xf32, #tpu.memory_space<vmem>>, %arg5: memref<64x1xf32, #tpu.memory_space<vmem>>, %arg6: memref<256x128xf32, #tpu.memory_space<vmem>>, %arg7: memref<1x1x128xf32, #tpu.memory_space<vmem>>, %arg8: memref<32x256xf32, #tpu.memory_space<vmem>>) attributes {dimension_semantics = [#tpu.dimension_semantics<parallel>], iteration_bounds = array<i64: 1>, scalar_prefetch = 0 : i64, scratch_operands = 1 : i64, tpu.core_type = #tpu.core_type<tc>, window_params = [{transform_indices = @transform_0, window_bounds = array<i64: 16, 256>}, {pipeline_mode = #tpu.pipeline_mode<synchronous>, transform_indices = @transform_1, window_bounds = array<i64: 32, 16>}, {pipeline_mode = #tpu.pipeline_mode<synchronous>, transform_indices = @transform_2, window_bounds = array<i64: 32, 1>}, {pipeline_mode = #tpu.pipeline_mode<synchronous>, transform_indices = @transform_3, window_bounds = array<i64: 64, 32>}, {pipeline_mode = #tpu.pipeline_mode<synchronous>, transform_indices = @transform_4, window_bounds = array<i64: 64, 1>}, {pipeline_mode = #tpu.pipeline_mode<synchronous>, transform_indices = @transform_5, window_bounds = array<i64: 256, 128>}, {transform_indices = @transform_6, window_bounds = array<i64: 1, 1, 128>}]} {
    %c0 = arith.constant 0 : index
    %c0_0 = arith.constant 0 : index
    %0 = vector.load %arg1[%c0, %c0_0] : memref<16x256xf32, #tpu.memory_space<vmem>>, vector<16x256xf32>
    %1 = vector.extract_strided_slice %0 {offsets = [0, 0], sizes = [8, 256], strides = [1, 1]} : vector<16x256xf32> to vector<8x256xf32>
    %2 = vector.extract_strided_slice %0 {offsets = [8, 0], sizes = [8, 256], strides = [1, 1]} : vector<16x256xf32> to vector<8x256xf32>
    %3 = arith.subf %1, %2 : vector<8x256xf32>
    %4 = arith.mulf %3, %3 : vector<8x256xf32>
    %cst = arith.constant dense<0.000000e+00> : vector<8xf32>
    %5 = vector.multi_reduction <add>, %4, %cst [1] : vector<8x256xf32> to vector<8xf32>
    %6 = vector.shape_cast %5 : vector<8xf32> to vector<8x1xf32>
    %cst_1 = arith.constant dense<0.000000e+00> : vector<1xf32>
    %7 = vector.multi_reduction <add>, %6, %cst_1 [0] : vector<8x1xf32> to vector<1xf32>
    %8 = vector.shape_cast %7 : vector<1xf32> to vector<1x1xf32>
    %c0_2 = arith.constant 0 : index
    %c0_3 = arith.constant 0 : index
    %9 = vector.load %arg8[%c0_2, %c0_3] : memref<32x256xf32, #tpu.memory_space<vmem>>, vector<16x256xf32>
    tpu.vector_store %arg8[%c0_2, %c0_3], %0 {strides = array<i32>} : memref<32x256xf32, #tpu.memory_space<vmem>>, vector<16x256xf32>,
    %10 = arith.mulf %1, %1 : vector<8x256xf32>
    %11 = arith.mulf %2, %2 : vector<8x256xf32>
    %12 = arith.addf %10, %11 : vector<8x256xf32>
    %c16 = arith.constant 16 : index
    %c0_4 = arith.constant 0 : index
    %13 = vector.load %arg8[%c16, %c0_4] : memref<32x256xf32, #tpu.memory_space<vmem>>, vector<8x256xf32>
    tpu.vector_store %arg8[%c16, %c0_4], %12 {strides = array<i32>} : memref<32x256xf32, #tpu.memory_space<vmem>>, vector<8x256xf32>,
    %14 = arith.mulf %1, %2 : vector<8x256xf32>
    %c24 = arith.constant 24 : index
    %c0_5 = arith.constant 0 : index
    %15 = vector.load %arg8[%c24, %c0_5] : memref<32x256xf32, #tpu.memory_space<vmem>>, vector<8x256xf32>
    tpu.vector_store %arg8[%c24, %c0_5], %14 {strides = array<i32>} : memref<32x256xf32, #tpu.memory_space<vmem>>, vector<8x256xf32>,
    %c0_6 = arith.constant 0 : index
    %c0_7 = arith.constant 0 : index
    %16 = vector.load %arg8[%c0_6, %c0_7] : memref<32x256xf32, #tpu.memory_space<vmem>>, vector<32x256xf32>
    %c0_8 = arith.constant 0 : index
    %c0_9 = arith.constant 0 : index
    %17 = vector.load %arg6[%c0_8, %c0_9] : memref<256x128xf32, #tpu.memory_space<vmem>>, vector<256x128xf32>
    %cst_10 = arith.constant dense<0.000000e+00> : vector<32x128xf32>
    %18 = tpu.matmul %16, %17, %cst_10 {dimension_numbers = #tpu.dot_dimension_numbers<[1], [0], [0], [1], [0, 0, 1, 1], [], []>} : vector<32x256xf32>, vector<256x128xf32>, vector<32x128xf32> -> vector<32x128xf32>
    %19 = vector.extract_strided_slice %18 {offsets = [0, 0], sizes = [8, 128], strides = [1, 1]} : vector<32x128xf32> to vector<8x128xf32>
    %20 = vector.extract_strided_slice %18 {offsets = [8, 0], sizes = [8, 128], strides = [1, 1]} : vector<32x128xf32> to vector<8x128xf32>
    %21 = vector.extract_strided_slice %18 {offsets = [16, 0], sizes = [8, 128], strides = [1, 1]} : vector<32x128xf32> to vector<8x128xf32>
    %22 = arith.mulf %19, %19 : vector<8x128xf32>
    %23 = arith.subf %21, %22 : vector<8x128xf32>
    %24 = arith.mulf %20, %20 : vector<8x128xf32>
    %25 = arith.subf %23, %24 : vector<8x128xf32>
    %26 = vector.extract_strided_slice %18 {offsets = [24, 0], sizes = [8, 128], strides = [1, 1]} : vector<32x128xf32> to vector<8x128xf32>
    %27 = arith.mulf %19, %20 : vector<8x128xf32>
    %28 = arith.subf %26, %27 : vector<8x128xf32>
    %cst_11 = arith.constant 2.000000e+00 : f32
    %29 = vector.broadcast %cst_11 : f32 to vector<8x128xf32>
    %30 = arith.mulf %29, %19 : vector<8x128xf32>
    %31 = arith.mulf %30, %20 : vector<8x128xf32>
    %cst_12 = arith.constant 9.99999974E-5 : f32
    %32 = vector.broadcast %cst_12 : f32 to vector<8x128xf32>
    %33 = arith.addf %31, %32 : vector<8x128xf32>
    %cst_13 = arith.constant 2.000000e+00 : f32
    %34 = vector.broadcast %cst_13 : f32 to vector<8x128xf32>
    %35 = arith.mulf %34, %28 : vector<8x128xf32>
    %cst_14 = arith.constant 8.99999984E-4 : f32
    %36 = vector.broadcast %cst_14 : f32 to vector<8x128xf32>
    %37 = arith.addf %35, %36 : vector<8x128xf32>
    %38 = arith.mulf %33, %37 : vector<8x128xf32>
    %39 = arith.mulf %19, %19 : vector<8x128xf32>
    %40 = arith.mulf %20, %20 : vector<8x128xf32>
    %41 = arith.addf %39, %40 : vector<8x128xf32>
    %cst_15 = arith.constant 9.99999974E-5 : f32
    %42 = vector.broadcast %cst_15 : f32 to vector<8x128xf32>
    %43 = arith.addf %41, %42 : vector<8x128xf32>
    %cst_16 = arith.constant 8.99999984E-4 : f32
    %44 = vector.broadcast %cst_16 : f32 to vector<8x128xf32>
    %45 = arith.addf %25, %44 : vector<8x128xf32>
    %46 = arith.mulf %43, %45 : vector<8x128xf32>
    %47 = tpu.reciprocal %46 {approx = true} : vector<8x128xf32> -> vector<8x128xf32>
    %48 = arith.mulf %46, %47 : vector<8x128xf32>
    %cst_17 = arith.constant 2.000000e+00 : f32
    %49 = vector.broadcast %cst_17 : f32 to vector<8x128xf32>
    %50 = arith.subf %49, %48 : vector<8x128xf32>
    %51 = arith.mulf %47, %50 : vector<8x128xf32>
    %52 = arith.mulf %46, %51 : vector<8x128xf32>
    %cst_18 = arith.constant 2.000000e+00 : f32
    %53 = vector.broadcast %cst_18 : f32 to vector<8x128xf32>
    %54 = arith.subf %53, %52 : vector<8x128xf32>
    %55 = arith.mulf %51, %54 : vector<8x128xf32>
    %56 = tpu.iota {dimensions = array<i32: 1>} : vector<8x128xi32>
    %c36_i32 = arith.constant 36 : i32
    %57 = vector.broadcast %c36_i32 : i32 to vector<8x128xi32>
    %58 = arith.cmpi slt, %56, %57 : vector<8x128xi32>
    %59 = arith.mulf %38, %55 : vector<8x128xf32>
    %cst_19 = arith.constant 0.000000e+00 : f32
    %60 = vector.broadcast %cst_19 : f32 to vector<8x128xf32>
    %61 = arith.select %58, %59, %60 : vector<8x128xi1>, vector<8x128xf32>
    %cst_20 = arith.constant dense<0.000000e+00> : vector<8xf32>
    %62 = vector.multi_reduction <add>, %61, %cst_20 [1] : vector<8x128xf32> to vector<8xf32>
    %63 = vector.shape_cast %62 : vector<8xf32> to vector<8x1xf32>
    %cst_21 = arith.constant dense<0.000000e+00> : vector<1xf32>
    %64 = vector.multi_reduction <add>, %63, %cst_21 [0] : vector<8x1xf32> to vector<1xf32>
    %65 = vector.shape_cast %64 : vector<1xf32> to vector<1x1xf32>
    %c0_22 = arith.constant 0 : index
    %c0_23 = arith.constant 0 : index
    %66 = vector.load %arg2[%c0_22, %c0_23] : memref<32x16xf32, #tpu.memory_space<vmem>>, vector<32x16xf32>
    %cst_24 = arith.constant dense<0.000000e+00> : vector<32x256xf32>
    %67 = tpu.matmul %66, %0, %cst_24 {dimension_numbers = #tpu.dot_dimension_numbers<[1], [0], [0], [1], [0, 0, 1, 1], [], []>} : vector<32x16xf32>, vector<16x256xf32>, vector<32x256xf32> -> vector<32x256xf32>
    %c0_25 = arith.constant 0 : index
    %c0_26 = arith.constant 0 : index
    %68 = vector.load %arg3[%c0_25, %c0_26] : memref<32x1xf32, #tpu.memory_space<vmem>>, vector<32x1xf32>
    %69 = vector.broadcast %68 : vector<32x1xf32> to vector<32x256xf32>
    %70 = arith.addf %67, %69 : vector<32x256xf32>
    %cst_27 = arith.constant 0.000000e+00 : f32
    %71 = vector.broadcast %cst_27 : f32 to vector<32x256xf32>
    %72 = arith.maximumf %70, %71 : vector<32x256xf32>
    %c0_28 = arith.constant 0 : index
    %c0_29 = arith.constant 0 : index
    %73 = vector.load %arg4[%c0_28, %c0_29] : memref<64x32xf32, #tpu.memory_space<vmem>>, vector<64x32xf32>
    %cst_30 = arith.constant dense<0.000000e+00> : vector<64x256xf32>
    %74 = tpu.matmul %73, %72, %cst_30 {dimension_numbers = #tpu.dot_dimension_numbers<[1], [0], [0], [1], [0, 0, 1, 1], [], []>} : vector<64x32xf32>, vector<32x256xf32>, vector<64x256xf32> -> vector<64x256xf32>
    %c0_31 = arith.constant 0 : index
    %c0_32 = arith.constant 0 : index
    %75 = vector.load %arg5[%c0_31, %c0_32] : memref<64x1xf32, #tpu.memory_space<vmem>>, vector<64x1xf32>
    %76 = vector.broadcast %75 : vector<64x1xf32> to vector<64x256xf32>
    %77 = arith.addf %74, %76 : vector<64x256xf32>
    %cst_33 = arith.constant 0.000000e+00 : f32
    %78 = vector.broadcast %cst_33 : f32 to vector<64x256xf32>
    %79 = arith.maximumf %77, %78 : vector<64x256xf32>
    %80 = vector.extract_strided_slice %72 {offsets = [0, 0], sizes = [16, 256], strides = [1, 1]} : vector<32x256xf32> to vector<16x256xf32>
    %81 = vector.extract_strided_slice %72 {offsets = [16, 0], sizes = [16, 256], strides = [1, 1]} : vector<32x256xf32> to vector<16x256xf32>
    %82 = arith.subf %80, %81 : vector<16x256xf32>
    %83 = vector.extract_strided_slice %79 {offsets = [0, 0], sizes = [32, 256], strides = [1, 1]} : vector<64x256xf32> to vector<32x256xf32>
    %84 = vector.extract_strided_slice %79 {offsets = [32, 0], sizes = [32, 256], strides = [1, 1]} : vector<64x256xf32> to vector<32x256xf32>
    %85 = arith.subf %83, %84 : vector<32x256xf32>
    %86 = arith.mulf %82, %82 : vector<16x256xf32>
    %cst_34 = arith.constant dense<0.000000e+00> : vector<16xf32>
    %87 = vector.multi_reduction <add>, %86, %cst_34 [1] : vector<16x256xf32> to vector<16xf32>
    %88 = vector.shape_cast %87 : vector<16xf32> to vector<16x1xf32>
    %cst_35 = arith.constant dense<0.000000e+00> : vector<1xf32>
    %89 = vector.multi_reduction <add>, %88, %cst_35 [0] : vector<16x1xf32> to vector<1xf32>
    %90 = vector.shape_cast %89 : vector<1xf32> to vector<1x1xf32>
    %91 = arith.mulf %85, %85 : vector<32x256xf32>
    %cst_36 = arith.constant dense<0.000000e+00> : vector<32xf32>
    %92 = vector.multi_reduction <add>, %91, %cst_36 [1] : vector<32x256xf32> to vector<32xf32>
    %93 = vector.shape_cast %92 : vector<32xf32> to vector<32x1xf32>
    %cst_37 = arith.constant dense<0.000000e+00> : vector<1xf32>
    %94 = vector.multi_reduction <add>, %93, %cst_37 [0] : vector<32x1xf32> to vector<1xf32>
    %95 = vector.shape_cast %94 : vector<1xf32> to vector<1x1xf32>
    %96 = tpu.iota {dimensions = array<i32: 1>} : vector<1x128xi32>
    %c0_i32 = arith.constant 0 : i32
    %97 = vector.broadcast %c0_i32 : i32 to vector<1x128xi32>
    %98 = arith.cmpi eq, %96, %97 : vector<1x128xi32>
    %cst_38 = arith.constant 0.000000e+00 : f32
    %99 = vector.shape_cast %8 : vector<1x1xf32> to vector<1x1xf32>
    %100 = vector.broadcast %99 : vector<1x1xf32> to vector<1x128xf32>
    %101 = vector.broadcast %cst_38 : f32 to vector<1x128xf32>
    %102 = arith.select %98, %100, %101 : vector<1x128xi1>, vector<1x128xf32>
    %c1_i32 = arith.constant 1 : i32
    %103 = vector.broadcast %c1_i32 : i32 to vector<1x128xi32>
    %104 = arith.cmpi eq, %96, %103 : vector<1x128xi32>
    %cst_39 = arith.constant 0.000000e+00 : f32
    %105 = vector.shape_cast %65 : vector<1x1xf32> to vector<1x1xf32>
    %106 = vector.broadcast %105 : vector<1x1xf32> to vector<1x128xf32>
    %107 = vector.broadcast %cst_39 : f32 to vector<1x128xf32>
    %108 = arith.select %104, %106, %107 : vector<1x128xi1>, vector<1x128xf32>
    %109 = arith.addf %102, %108 : vector<1x128xf32>
    %c2_i32 = arith.constant 2 : i32
    %110 = vector.broadcast %c2_i32 : i32 to vector<1x128xi32>
    %111 = arith.cmpi eq, %96, %110 : vector<1x128xi32>
    %cst_40 = arith.constant 0.000000e+00 : f32
    %112 = vector.shape_cast %90 : vector<1x1xf32> to vector<1x1xf32>
    %113 = vector.broadcast %112 : vector<1x1xf32> to vector<1x128xf32>
    %114 = vector.broadcast %cst_40 : f32 to vector<1x128xf32>
    %115 = arith.select %111, %113, %114 : vector<1x128xi1>, vector<1x128xf32>
    %116 = arith.addf %109, %115 : vector<1x128xf32>
    %c3_i32 = arith.constant 3 : i32
    %117 = vector.broadcast %c3_i32 : i32 to vector<1x128xi32>
    %118 = arith.cmpi eq, %96, %117 : vector<1x128xi32>
    %cst_41 = arith.constant 0.000000e+00 : f32
    %119 = vector.shape_cast %95 : vector<1x1xf32> to vector<1x1xf32>
    %120 = vector.broadcast %119 : vector<1x1xf32> to vector<1x128xf32>
    %121 = vector.broadcast %cst_41 : f32 to vector<1x128xf32>
    %122 = arith.select %118, %120, %121 : vector<1x128xi1>, vector<1x128xf32>
    %123 = arith.addf %116, %122 : vector<1x128xf32>
    %c0_42 = arith.constant 0 : index
    %c0_43 = arith.constant 0 : index
    %c0_44 = arith.constant 0 : index
    %124 = vector.load %arg7[%c0_42, %c0_43, %c0_44] : memref<1x1x128xf32, #tpu.memory_space<vmem>>, vector<1x1x128xf32>
    %125 = vector.shape_cast %124 : vector<1x1x128xf32> to vector<1x128xf32>
    %126 = vector.shape_cast %123 : vector<1x128xf32> to vector<1x1x128xf32>
    tpu.vector_store %arg7[%c0_42, %c0_43, %c0_44], %126 {strides = array<i32>} : memref<1x1x128xf32, #tpu.memory_space<vmem>>, vector<1x1x128xf32>,
    return
  }
  func.func @transform_0(%arg0: i32) -> (i32, i32) {
    %c0_i32 = arith.constant 0 : i32
    %c0_i32_0 = arith.constant 0 : i32
    return %arg0, %c0_i32 : i32, i32
  }
  func.func @transform_1(%arg0: i32) -> (i32, i32) {
    %c0_i32 = arith.constant 0 : i32
    %c0_i32_0 = arith.constant 0 : i32
    %c0_i32_1 = arith.constant 0 : i32
    return %c0_i32, %c0_i32_0 : i32, i32
  }
  func.func @transform_2(%arg0: i32) -> (i32, i32) {
    %c0_i32 = arith.constant 0 : i32
    %c0_i32_0 = arith.constant 0 : i32
    %c0_i32_1 = arith.constant 0 : i32
    return %c0_i32, %c0_i32_0 : i32, i32
  }
  func.func @transform_3(%arg0: i32) -> (i32, i32) {
    %c0_i32 = arith.constant 0 : i32
    %c0_i32_0 = arith.constant 0 : i32
    %c0_i32_1 = arith.constant 0 : i32
    return %c0_i32, %c0_i32_0 : i32, i32
  }
  func.func @transform_4(%arg0: i32) -> (i32, i32) {
    %c0_i32 = arith.constant 0 : i32
    %c0_i32_0 = arith.constant 0 : i32
    %c0_i32_1 = arith.constant 0 : i32
    return %c0_i32, %c0_i32_0 : i32, i32
  }
  func.func @transform_5(%arg0: i32) -> (i32, i32) {
    %c0_i32 = arith.constant 0 : i32
    %c0_i32_0 = arith.constant 0 : i32
    %c0_i32_1 = arith.constant 0 : i32
    return %c0_i32, %c0_i32_0 : i32, i32
  }
  func.func @transform_6(%arg0: i32) -> (i32, i32, i32) {
    %c0_i32 = arith.constant 0 : i32
    %c0_i32_0 = arith.constant 0 : i32
    %c0_i32_1 = arith.constant 0 : i32
    return %arg0, %c0_i32, %c0_i32_0 : i32, i32, i32
  }
}

</mosaic_0001>

<llo_original>
// kernel: tpu_custom_call.1
$region0: #{tpu_custom_call.1}
  #allocation0 [shape = 'u32[]', space=smem, size = 0x4, offset = 0x4, fixed_abs, tag = 'smem constant byte address 0x4 - core index']
  #allocation1 [shape = 'u32[72,128]{1,0:T(1,128)}', space=vmem, size = 0x9000, scoped, tag = 'internal scratch']
  #allocation2 [shape = 'f32[32,256]{1,0:T(8,128)}', space=vmem, size = 0x8000, scoped, tag = 'scratch operand']
  %s0 = inlined_call_operand.vmem [shape: f32[16,256], index: 0, kind: input, shape index: {}]
  %s1 = inlined_call_operand.vmem [shape: f32[32,16], index: 1, kind: input, shape index: {}]
  %s2 = inlined_call_operand.vmem [shape: f32[32,1], index: 2, kind: input, shape index: {}]
  %s3 = inlined_call_operand.vmem [shape: f32[64,32], index: 3, kind: input, shape index: {}]
  %s4 = inlined_call_operand.vmem [shape: f32[64,1], index: 4, kind: input, shape index: {}]
  %s5 = inlined_call_operand.hbm [shape: f32[256,128], index: 5, kind: input, shape index: {}]
  %s6 = inlined_call_operand.hbm [shape: f32[1,1,128], index: 6, kind: output, shape index: {}]
  %s7 = sld [smem:[#allocation0]]
  $region38: #{tpu_custom_call.1} parent=0
    _
  %s9 = ssub.s32 1, %s7
  %s10 = scalar_select 0, %s9, %s7
  $region1: #{tpu_custom_call.1} parent=0
    #allocation3 [shape = 'u8[131072]{0}', space=vmem, size = 0x20000, scoped, tag = 'input window, operand 5, single buffered']
    #allocation4 [shape = 's32[1]{0}', space=sflag, size = 0x4, scoped, tag = 'scoped memory for tpu_custom_call.1']
    #allocation5 [shape = 's32[1]{0}', space=sflag, size = 0x4, scoped, tag = 'scoped memory for tpu_custom_call.1']
    #allocation6 [shape = 'u8[512]{0}', space=vmem, size = 0x400, scoped, tag = 'output window, operand 0, single buffered']
    %11 = vsyncpa [#allocation4], 0
    %12 = vsyncpa [#allocation5], 0
    // Predicated region
    $region2: #{tpu_custom_call.1} parent=1 // pred_check
      _
    $region3: #{tpu_custom_call.1} parent=1 // pred_check_branch
      %14 = sbr.rel (0) target = $region5
    $region4: #{tpu_custom_call.1} parent=1 // pred_region
      _
    $region5: #{tpu_custom_call.1} parent=1 // pred_fallthru
      _
    // Predicated region
    $region6: #{tpu_custom_call.1} parent=1 // pred_check
      _
    $region7: #{tpu_custom_call.1} parent=1 // pred_check_branch
      %16 = sbr.rel (0) target = $region9
    $region8: #{tpu_custom_call.1} parent=1 // pred_region
      _
    $region9: #{tpu_custom_call.1} parent=1 // pred_fallthru
      _
    // Predicated region
    $region10: #{tpu_custom_call.1} parent=1 // pred_check
      _
    $region11: #{tpu_custom_call.1} parent=1 // pred_check_branch
      %18 = sbr.rel (0) target = $region13
    $region12: #{tpu_custom_call.1} parent=1 // pred_region
      _
    $region13: #{tpu_custom_call.1} parent=1 // pred_fallthru
      _
    // Predicated region
    $region14: #{tpu_custom_call.1} parent=1 // pred_check
      _
    $region15: #{tpu_custom_call.1} parent=1 // pred_check_branch
      %20 = sbr.rel (0) target = $region17
    $region16: #{tpu_custom_call.1} parent=1 // pred_region
      _
    $region17: #{tpu_custom_call.1} parent=1 // pred_fallthru
      _
    // Predicated region
    $region18: #{tpu_custom_call.1} parent=1 // pred_check
      _
    $region19: #{tpu_custom_call.1} parent=1 // pred_check_branch
      %22 = sbr.rel (0) target = $region21
    $region20: #{tpu_custom_call.1} parent=1 // pred_region
      _
    $region21: #{tpu_custom_call.1} parent=1 // pred_fallthru
      _
    // Predicated region
    $region22: #{tpu_custom_call.1} parent=1 // pred_check
      _
    $region23: #{tpu_custom_call.1} parent=1 // pred_check_branch
      %24 = sbr.rel (0) target = $region25
    $region24: #{tpu_custom_call.1} parent=1 // pred_region
      %26 = vsyncadd [#allocation4], 0
      %s27 = sshll.u32 %s5, 4
      %s28 = int_to_ptr.hbm [resolvable:$true] %s27
      %s29 = sshll.u32 [#allocation3], 4
      %s30 = int_to_ptr.vmem [resolvable:$true] %s29
      %35 = dma.hbm_to_vmem [thread:$0]  %s28, 4096, %s30, [#allocation4], 128, 128, 8
    $region25: #{tpu_custom_call.1} parent=1 // pred_fallthru
      _
    // Predicated region
    $region26: #{tpu_custom_call.1} parent=1 // pred_check
      _
    $region27: #{tpu_custom_call.1} parent=1 // pred_check_branch
      %37 = sbr.rel (0) target = $region29
    $region28: #{tpu_custom_call.1} parent=1 // pred_region
      %39 = dma.done [#allocation4], 4096
    $region29: #{tpu_custom_call.1} parent=1 // pred_fallthru
      _
    %v40 = vld [vmem:[%s0] sm:$0xff]
    %v41 = vld [vmem:[%s0 + $0x8] sm:$0xff]
    %v42 = vld [vmem:[%s0 + $0x10] sm:$0xff]
    %v43 = vld [vmem:[%s0 + $0x18] sm:$0xff]
    %v44 = vsub.f32 %v40, %v42
    %v45 = vsub.f32 %v41, %v43
    %v46 = vmul.f32 %v44, %v44
    %v47 = vmul.f32 %v45, %v45
    %v48 = vadd.f32 %v46, %v47
    %49 = vadd.xlane.f32.xlu0 %v48
    %v50 = vpop.xlane.xlu0 %49
    %v51 = vrot.slane %v50, 4
    %v52 = vadd.f32 %v50, %v51
    %v53 = vrot.slane %v52, 2
    %v54 = vadd.f32 %v52, %v53
    %v55 = vrot.slane %v54, 1
    %v56 = vadd.f32 %v54, %v55
    %57 = vst [vmem:[#allocation2] sm:$0xff] %v40
    %58 = vst [vmem:[#allocation2 + $0x8] sm:$0xff] %v41
    %59 = vst [vmem:[#allocation2 + $0x10] sm:$0xff] %v42
    %60 = vst [vmem:[#allocation2 + $0x18] sm:$0xff] %v43
    %v61 = vmul.f32 %v40, %v40
    %v62 = vmul.f32 %v41, %v41
    %v63 = vmul.f32 %v42, %v42
    %v64 = vmul.f32 %v43, %v43
    %v65 = vadd.f32 %v61, %v63
    %v66 = vadd.f32 %v62, %v64
    %67 = vst [vmem:[#allocation2 + $0x20] sm:$0xff] %v65
    %68 = vst [vmem:[#allocation2 + $0x28] sm:$0xff] %v66
    %v69 = vmul.f32 %v40, %v42
    %v70 = vmul.f32 %v41, %v43
    %71 = vst [vmem:[#allocation2 + $0x30] sm:$0xff] %v69
    %72 = vst [vmem:[#allocation2 + $0x38] sm:$0xff] %v70
    %v73 = vld [vmem:[#allocation2] sm:$0xff]
    %v74 = vld [vmem:[#allocation2 + $0x8] sm:$0xff]
    %v75 = vld [vmem:[#allocation2 + $0x10] sm:$0xff]
    %v76 = vld [vmem:[#allocation2 + $0x18] sm:$0xff]
    %v77 = vld [vmem:[#allocation2 + $0x20] sm:$0xff]
    %v78 = vld [vmem:[#allocation2 + $0x28] sm:$0xff]
    %v79 = vld [vmem:[#allocation2 + $0x30] sm:$0xff]
    %v80 = vld [vmem:[#allocation2 + $0x38] sm:$0xff]
    %v81 = vld [vmem:[#allocation3] sm:$0xff]
    %v82 = vld [vmem:[#allocation3 + $0x8] sm:$0xff]
    %v83 = vld [vmem:[#allocation3 + $0x10] sm:$0xff]
    %v84 = vld [vmem:[#allocation3 + $0x18] sm:$0xff]
    %v85 = vld [vmem:[#allocation3 + $0x20] sm:$0xff]
    %v86 = vld [vmem:[#allocation3 + $0x28] sm:$0xff]
    %v87 = vld [vmem:[#allocation3 + $0x30] sm:$0xff]
    %v88 = vld [vmem:[#allocation3 + $0x38] sm:$0xff]
    %v89 = vld [vmem:[#allocation3 + $0x40] sm:$0xff]
    %v90 = vld [vmem:[#allocation3 + $0x48] sm:$0xff]
    %v91 = vld [vmem:[#allocation3 + $0x50] sm:$0xff]
    %v92 = vld [vmem:[#allocation3 + $0x58] sm:$0xff]
    %v93 = vld [vmem:[#allocation3 + $0x60] sm:$0xff]
    %v94 = vld [vmem:[#allocation3 + $0x68] sm:$0xff]
    %v95 = vld [vmem:[#allocation3 + $0x70] sm:$0xff]
    %v96 = vld [vmem:[#allocation3 + $0x78] sm:$0xff]
    %v97 = vld [vmem:[#allocation3 + $0x80] sm:$0xff]
    %v98 = vld [vmem:[#allocation3 + $0x88] sm:$0xff]
    %v99 = vld [vmem:[#allocation3 + $0x90] sm:$0xff]
    %v100 = vld [vmem:[#allocation3 + $0x98] sm:$0xff]
    %v101 = vld [vmem:[#allocation3 + $0xa0] sm:$0xff]
    %v102 = vld [vmem:[#allocation3 + $0xa8] sm:$0xff]
    %v103 = vld [vmem:[#allocation3 + $0xb0] sm:$0xff]
    %v104 = vld [vmem:[#allocation3 + $0xb8] sm:$0xff]
    %v105 = vld [vmem:[#allocation3 + $0xc0] sm:$0xff]
    %v106 = vld [vmem:[#allocation3 + $0xc8] sm:$0xff]
    %v107 = vld [vmem:[#allocation3 + $0xd0] sm:$0xff]
    %v108 = vld [vmem:[#allocation3 + $0xd8] sm:$0xff]
    %v109 = vld [vmem:[#allocation3 + $0xe0] sm:$0xff]
    %v110 = vld [vmem:[#allocation3 + $0xe8] sm:$0xff]
    %v111 = vld [vmem:[#allocation3 + $0xf0] sm:$0xff]
    %v112 = vld [vmem:[#allocation3 + $0xf8] sm:$0xff]
    %113 = vmatpush.msra.mxu0 %v96
    %114 = vmatpush.msra.mxu0 %v95
    %115 = vmatpush.msra.mxu0 %v94
    %116 = vmatpush.msra.mxu0 %v93
    %117 = vmatpush.msra.mxu0 %v92
    %118 = vmatpush.msra.mxu0 %v91
    %119 = vmatpush.msra.mxu0 %v90
    %120 = vmatpush.msra.mxu0 %v89
    %121 = vmatpush.msra.mxu0 %v88
    %122 = vmatpush.msra.mxu0 %v87
    %123 = vmatpush.msra.mxu0 %v86
    %124 = vmatpush.msra.mxu0 %v85
    %125 = vmatpush.msra.mxu0 %v84
    %126 = vmatpush.msra.mxu0 %v83
    %127 = vmatpush.msra.mxu0 %v82
    %128 = vmatpush.msra.mxu0 %v81
    %129 = vmatmul.f32.gmra.mxu0 %v73
    %v130 = vpop.f32.mrf.mxu0
    %v131 = vadd.f32 0.0, %v130
    %132 = vmatmul.f32.gmra.mxu0 %v75
    %v133 = vpop.f32.mrf.mxu0
    %v134 = vadd.f32 0.0, %v133
    %135 = vmatmul.f32.gmra.mxu0 %v77
    %v136 = vpop.f32.mrf.mxu0
    %v137 = vadd.f32 0.0, %v136
    %138 = vmatmul.f32.gmra.mxu0 %v79
    %v139 = vpop.f32.mrf.mxu0
    %v140 = vadd.f32 0.0, %v139
    %141 = vdwg.mxu0
    %142 = vmatpush.msra.mxu0 %v112
    %143 = vmatpush.msra.mxu0 %v111
    %144 = vmatpush.msra.mxu0 %v110
    %145 = vmatpush.msra.mxu0 %v109
    %146 = vmatpush.msra.mxu0 %v108
    %147 = vmatpush.msra.mxu0 %v107
    %148 = vmatpush.msra.mxu0 %v106
    %149 = vmatpush.msra.mxu0 %v105
    %150 = vmatpush.msra.mxu0 %v104
    %151 = vmatpush.msra.mxu0 %v103
    %152 = vmatpush.msra.mxu0 %v102
    %153 = vmatpush.msra.mxu0 %v101
    %154 = vmatpush.msra.mxu0 %v100
    %155 = vmatpush.msra.mxu0 %v99
    %156 = vmatpush.msra.mxu0 %v98
    %157 = vmatpush.msra.mxu0 %v97
    %158 = vmatmul.f32.gmra.mxu0 %v74
    %v159 = vpop.f32.mrf.mxu0
    %v160 = vadd.f32 %v131, %v159
    %161 = vmatmul.f32.gmra.mxu0 %v76
    %v162 = vpop.f32.mrf.mxu0
    %v163 = vadd.f32 %v134, %v162
    %164 = vmatmul.f32.gmra.mxu0 %v78
    %v165 = vpop.f32.mrf.mxu0
    %v166 = vadd.f32 %v137, %v165
    %167 = vmatmul.f32.gmra.mxu0 %v80
    %v168 = vpop.f32.mrf.mxu0
    %v169 = vadd.f32 %v140, %v168
    %170 = vdwg.mxu0
    %v171 = vmul.f32 %v160, %v160
    %v172 = vsub.f32 %v166, %v171
    %v173 = vmul.f32 %v163, %v163
    %v174 = vsub.f32 %v172, %v173
    %v175 = vmul.f32 %v160, %v163
    %v176 = vsub.f32 %v169, %v175
    %v177 = vmul.f32 %v160, 2.0
    %v178 = vmul.f32 %v177, %v163
    %v179 = vadd.f32 %v178, 0.0001
    %v180 = vmul.f32 %v176, 2.0
    %v181 = vadd.f32 %v180, 0.0009
    %v182 = vmul.f32 %v179, %v181
    %v183 = vadd.f32 %v171, %v173
    %v184 = vadd.f32 %v183, 0.0001
    %v185 = vadd.f32 %v174, 0.0009
    %v186 = vmul.f32 %v184, %v185
    %v187 = vrcp.pop %v186
    %v188 = vmul.f32 %v186, %v187
    %v189 = vsub.f32 2.0, %v188
    %v190 = vmul.f32 %v187, %v189
    %v191 = vmul.f32 %v186, %v190
    %v192 = vsub.f32 2.0, %v191
    %v193 = vmul.f32 %v190, %v192
    %v194 = vlaneseq
    %v195 = vand.u32 %v194, 127
    %vm196 = vcmp.lt.s32.totalorder %v195, 36
    %v197 = vmul.f32 %v182, %v193
    %v198 = vsel %vm196, %v197, 0.0
    %199 = vadd.xlane.f32.xlu0 %v198
    %v200 = vpop.xlane.xlu0 %199
    %v201 = vrot.slane %v200, 4
    %v202 = vadd.f32 %v200, %v201
    %v203 = vrot.slane %v202, 2
    %v204 = vadd.f32 %v202, %v203
    %v205 = vrot.slane %v204, 1
    %v206 = vadd.f32 %v204, %v205
    %v207 = vld [vmem:[%s1] sm:$0xff]
    %v208 = vld [vmem:[%s1 + $0x8] sm:$0xff]
    %v209 = vld [vmem:[%s1 + $0x10] sm:$0xff]
    %v210 = vld [vmem:[%s1 + $0x18] sm:$0xff]
    %v211 = vld [vmem:[%s2] sm:$0xff]
    %v212 = vld [vmem:[%s2 + $0x8] sm:$0xff]
    %v213 = vld [vmem:[%s2 + $0x10] sm:$0xff]
    %v214 = vld [vmem:[%s2 + $0x18] sm:$0xff]
    %216 = vset.pattern.permute.xlu0 0
    %217 = vperm.xlu0 %216, %v211
    %v218 = vpop.permute.xlu0 %217
    %221 = vset.pattern.permute.xlu0 0
    %222 = vperm.xlu0 %221, %v212
    %v223 = vpop.permute.xlu0 %222
    %226 = vset.pattern.permute.xlu0 0
    %227 = vperm.xlu0 %226, %v213
    %v228 = vpop.permute.xlu0 %227
    %231 = vset.pattern.permute.xlu0 0
    %232 = vperm.xlu0 %231, %v214
    %v233 = vpop.permute.xlu0 %232
    %vm235 = vcmask 130048
    %v237 = vsel %vm235, %v207, 0
    %v240 = vsel %vm235, %v208, 0
    %v243 = vsel %vm235, %v209, 0
    %v246 = vsel %vm235, %v210, 0
    %248 = vmatpush.msra.mxu0 0.0
    %249 = vmatpush.msra.mxu0 0.0
    %250 = vmatpush.msra.mxu0 0.0
    %251 = vmatpush.msra.mxu0 0.0
    %252 = vmatpush.msra.mxu0 0.0
    %253 = vmatpush.msra.mxu0 0.0
    %254 = vmatpush.msra.mxu0 0.0
    %255 = vmatpush.msra.mxu0 0.0
    %256 = vmatpush.msra.mxu0 0.0
    %257 = vmatpush.msra.mxu0 0.0
    %258 = vmatpush.msra.mxu0 0.0
    %259 = vmatpush.msra.mxu0 0.0
    %260 = vmatpush.msra.mxu0 0.0
    %261 = vmatpush.msra.mxu0 0.0
    %262 = vmatpush.msra.mxu0 %v42
    %263 = vmatpush.msra.mxu0 %v40
    %264 = vmatmul.f32.gmra.mxu0 %v237
    %v265 = vpop.f32.mrf.mxu0
    %v266 = vadd.f32 %v218, %v265
    %267 = vmatmul.f32.gmra.mxu0 %v240
    %v268 = vpop.f32.mrf.mxu0
    %v269 = vadd.f32 %v223, %v268
    %270 = vmatmul.f32.gmra.mxu0 %v243
    %v271 = vpop.f32.mrf.mxu0
    %v272 = vadd.f32 %v228, %v271
    %273 = vmatmul.f32.gmra.mxu0 %v246
    %v274 = vpop.f32.mrf.mxu0
    %v275 = vadd.f32 %v233, %v274
    %276 = vdwg.mxu0
    %277 = vmatpush.msra.mxu0 0.0
    %278 = vmatpush.msra.mxu0 0.0
    %279 = vmatpush.msra.mxu0 0.0
    %280 = vmatpush.msra.mxu0 0.0
    %281 = vmatpush.msra.mxu0 0.0
    %282 = vmatpush.msra.mxu0 0.0
    %283 = vmatpush.msra.mxu0 0.0
    %284 = vmatpush.msra.mxu0 0.0
    %285 = vmatpush.msra.mxu0 0.0
    %286 = vmatpush.msra.mxu0 0.0
    %287 = vmatpush.msra.mxu0 0.0
    %288 = vmatpush.msra.mxu0 0.0
    %289 = vmatpush.msra.mxu0 0.0
    %290 = vmatpush.msra.mxu0 0.0
    %291 = vmatpush.msra.mxu0 %v43
    %292 = vmatpush.msra.mxu0 %v41
    %293 = vmatmul.f32.gmra.mxu0 %v237
    %v294 = vpop.f32.mrf.mxu0
    %v295 = vadd.f32 %v218, %v294
    %296 = vmatmul.f32.gmra.mxu0 %v240
    %v297 = vpop.f32.mrf.mxu0
    %v298 = vadd.f32 %v223, %v297
    %299 = vmatmul.f32.gmra.mxu0 %v243
    %v300 = vpop.f32.mrf.mxu0
    %v301 = vadd.f32 %v228, %v300
    %302 = vmatmul.f32.gmra.mxu0 %v246
    %v303 = vpop.f32.mrf.mxu0
    %v304 = vadd.f32 %v233, %v303
    %305 = vdwg.mxu0
    %v306 = vmax.f32 %v266, 0.0
    %v307 = vmax.f32 %v295, 0.0
    %v308 = vmax.f32 %v269, 0.0
    %v309 = vmax.f32 %v298, 0.0
    %v310 = vmax.f32 %v272, 0.0
    %v311 = vmax.f32 %v301, 0.0
    %v312 = vmax.f32 %v275, 0.0
    %v313 = vmax.f32 %v304, 0.0
    %v314 = vld [vmem:[%s3] sm:$0xff]
    %v315 = vld [vmem:[%s3 + $0x8] sm:$0xff]
    %v316 = vld [vmem:[%s3 + $0x10] sm:$0xff]
    %v317 = vld [vmem:[%s3 + $0x18] sm:$0xff]
    %v318 = vld [vmem:[%s3 + $0x20] sm:$0xff]
    %v319 = vld [vmem:[%s3 + $0x28] sm:$0xff]
    %v320 = vld [vmem:[%s3 + $0x30] sm:$0xff]
    %v321 = vld [vmem:[%s3 + $0x38] sm:$0xff]
    %v322 = vld [vmem:[%s4] sm:$0xff]
    %v323 = vld [vmem:[%s4 + $0x8] sm:$0xff]
    %v324 = vld [vmem:[%s4 + $0x10] sm:$0xff]
    %v325 = vld [vmem:[%s4 + $0x18] sm:$0xff]
    %v326 = vld [vmem:[%s4 + $0x20] sm:$0xff]
    %v327 = vld [vmem:[%s4 + $0x28] sm:$0xff]
    %v328 = vld [vmem:[%s4 + $0x30] sm:$0xff]
    %v329 = vld [vmem:[%s4 + $0x38] sm:$0xff]
    %331 = vset.pattern.permute.xlu0 0
    %332 = vperm.xlu0 %331, %v322
    %v333 = vpop.permute.xlu0 %332
    %336 = vset.pattern.permute.xlu0 0
    %337 = vperm.xlu0 %336, %v323
    %v338 = vpop.permute.xlu0 %337
    %341 = vset.pattern.permute.xlu0 0
    %342 = vperm.xlu0 %341, %v324
    %v343 = vpop.permute.xlu0 %342
    %346 = vset.pattern.permute.xlu0 0
    %347 = vperm.xlu0 %346, %v325
    %v348 = vpop.permute.xlu0 %347
    %351 = vset.pattern.permute.xlu0 0
    %352 = vperm.xlu0 %351, %v326
    %v353 = vpop.permute.xlu0 %352
    %356 = vset.pattern.permute.xlu0 0
    %357 = vperm.xlu0 %356, %v327
    %v358 = vpop.permute.xlu0 %357
    %361 = vset.pattern.permute.xlu0 0
    %362 = vperm.xlu0 %361, %v328
    %v363 = vpop.permute.xlu0 %362
    %366 = vset.pattern.permute.xlu0 0
    %367 = vperm.xlu0 %366, %v329
    %v368 = vpop.permute.xlu0 %367
    %vm370 = vcmask 261120
    %v372 = vsel %vm370, %v314, 0
    %v375 = vsel %vm370, %v315, 0
    %v378 = vsel %vm370, %v316, 0
    %v381 = vsel %vm370, %v317, 0
    %v384 = vsel %vm370, %v318, 0
    %v387 = vsel %vm370, %v319, 0
    %v390 = vsel %vm370, %v320, 0
    %v393 = vsel %vm370, %v321, 0
    %395 = vmatpush.msra.mxu0 0.0
    %396 = vmatpush.msra.mxu0 0.0
    %397 = vmatpush.msra.mxu0 0.0
    %398 = vmatpush.msra.mxu0 0.0
    %399 = vmatpush.msra.mxu0 0.0
    %400 = vmatpush.msra.mxu0 0.0
    %401 = vmatpush.msra.mxu0 0.0
    %402 = vmatpush.msra.mxu0 0.0
    %403 = vmatpush.msra.mxu0 0.0
    %404 = vmatpush.msra.mxu0 0.0
    %405 = vmatpush.msra.mxu0 0.0
    %406 = vmatpush.msra.mxu0 0.0
    %407 = vmatpush.msra.mxu0 %v312
    %408 = vmatpush.msra.mxu0 %v310
    %409 = vmatpush.msra.mxu0 %v308
    %410 = vmatpush.msra.mxu0 %v306
    %411 = vmatmul.f32.gmra.mxu0 %v372
    %v412 = vpop.f32.mrf.mxu0
    %v413 = vadd.f32 %v333, %v412
    %414 = vmatmul.f32.gmra.mxu0 %v375
    %v415 = vpop.f32.mrf.mxu0
    %v416 = vadd.f32 %v338, %v415
    %417 = vmatmul.f32.gmra.mxu0 %v378
    %v418 = vpop.f32.mrf.mxu0
    %v419 = vadd.f32 %v343, %v418
    %420 = vmatmul.f32.gmra.mxu0 %v381
    %v421 = vpop.f32.mrf.mxu0
    %v422 = vadd.f32 %v348, %v421
    %423 = vmatmul.f32.gmra.mxu0 %v384
    %v424 = vpop.f32.mrf.mxu0
    %v425 = vadd.f32 %v353, %v424
    %426 = vmatmul.f32.gmra.mxu0 %v387
    %v427 = vpop.f32.mrf.mxu0
    %v428 = vadd.f32 %v358, %v427
    %429 = vmatmul.f32.gmra.mxu0 %v390
    %v430 = vpop.f32.mrf.mxu0
    %v431 = vadd.f32 %v363, %v430
    %432 = vmatmul.f32.gmra.mxu0 %v393
    %v433 = vpop.f32.mrf.mxu0
    %v434 = vadd.f32 %v368, %v433
    %435 = vdwg.mxu0
    %436 = vmatpush.msra.mxu0 0.0
    %437 = vmatpush.msra.mxu0 0.0
    %438 = vmatpush.msra.mxu0 0.0
    %439 = vmatpush.msra.mxu0 0.0
    %440 = vmatpush.msra.mxu0 0.0
    %441 = vmatpush.msra.mxu0 0.0
    %442 = vmatpush.msra.mxu0 0.0
    %443 = vmatpush.msra.mxu0 0.0
    %444 = vmatpush.msra.mxu0 0.0
    %445 = vmatpush.msra.mxu0 0.0
    %446 = vmatpush.msra.mxu0 0.0
    %447 = vmatpush.msra.mxu0 0.0
    %448 = vmatpush.msra.mxu0 %v313
    %449 = vmatpush.msra.mxu0 %v311
    %450 = vmatpush.msra.mxu0 %v309
    %451 = vmatpush.msra.mxu0 %v307
    %452 = vmatmul.f32.gmra.mxu0 %v372
    %v453 = vpop.f32.mrf.mxu0
    %v454 = vadd.f32 %v333, %v453
    %455 = vmatmul.f32.gmra.mxu0 %v375
    %v456 = vpop.f32.mrf.mxu0
    %v457 = vadd.f32 %v338, %v456
    %458 = vmatmul.f32.gmra.mxu0 %v378
    %v459 = vpop.f32.mrf.mxu0
    %v460 = vadd.f32 %v343, %v459
    %461 = vmatmul.f32.gmra.mxu0 %v381
    %v462 = vpop.f32.mrf.mxu0
    %v463 = vadd.f32 %v348, %v462
    %464 = vmatmul.f32.gmra.mxu0 %v384
    %v465 = vpop.f32.mrf.mxu0
    %v466 = vadd.f32 %v353, %v465
    %467 = vmatmul.f32.gmra.mxu0 %v387
    %v468 = vpop.f32.mrf.mxu0
    %v469 = vadd.f32 %v358, %v468
    %470 = vmatmul.f32.gmra.mxu0 %v390
    %v471 = vpop.f32.mrf.mxu0
    %v472 = vadd.f32 %v363, %v471
    %473 = vmatmul.f32.gmra.mxu0 %v393
    %v474 = vpop.f32.mrf.mxu0
    %v475 = vadd.f32 %v368, %v474
    %476 = vdwg.mxu0
    %v477 = vmax.f32 %v413, 0.0
    %v478 = vmax.f32 %v454, 0.0
    %v479 = vmax.f32 %v416, 0.0
    %v480 = vmax.f32 %v457, 0.0
    %v481 = vmax.f32 %v419, 0.0
    %v482 = vmax.f32 %v460, 0.0
    %v483 = vmax.f32 %v422, 0.0
    %v484 = vmax.f32 %v463, 0.0
    %v485 = vmax.f32 %v425, 0.0
    %v486 = vmax.f32 %v466, 0.0
    %v487 = vmax.f32 %v428, 0.0
    %v488 = vmax.f32 %v469, 0.0
    %v489 = vmax.f32 %v431, 0.0
    %v490 = vmax.f32 %v472, 0.0
    %v491 = vmax.f32 %v434, 0.0
    %v492 = vmax.f32 %v475, 0.0
    %v493 = vsub.f32 %v306, %v310
    %v494 = vsub.f32 %v307, %v311
    %v495 = vsub.f32 %v308, %v312
    %v496 = vsub.f32 %v309, %v313
    %v497 = vsub.f32 %v477, %v485
    %v498 = vsub.f32 %v478, %v486
    %v499 = vsub.f32 %v479, %v487
    %v500 = vsub.f32 %v480, %v488
    %v501 = vsub.f32 %v481, %v489
    %v502 = vsub.f32 %v482, %v490
    %v503 = vsub.f32 %v483, %v491
    %v504 = vsub.f32 %v484, %v492
    %v505 = vmul.f32 %v493, %v493
    %v506 = vmul.f32 %v494, %v494
    %v507 = vmul.f32 %v495, %v495
    %v508 = vmul.f32 %v496, %v496
    %v509 = vadd.f32 %v505, %v506
    %510 = vadd.xlane.f32.xlu0 %v509
    %v511 = vpop.xlane.xlu0 %510
    %v512 = vadd.f32 %v507, %v508
    %513 = vadd.xlane.f32.xlu0 %v512
    %v514 = vpop.xlane.xlu0 %513
    %v515 = vadd.f32 %v511, %v514
    %v516 = vrot.slane %v515, 4
    %v517 = vadd.f32 %v515, %v516
    %v518 = vrot.slane %v517, 2
    %v519 = vadd.f32 %v517, %v518
    %v520 = vrot.slane %v519, 1
    %v521 = vadd.f32 %v519, %v520
    %v522 = vmul.f32 %v497, %v497
    %v523 = vmul.f32 %v498, %v498
    %v524 = vmul.f32 %v499, %v499
    %v525 = vmul.f32 %v500, %v500
    %v526 = vmul.f32 %v501, %v501
    %v527 = vmul.f32 %v502, %v502
    %v528 = vmul.f32 %v503, %v503
    %v529 = vmul.f32 %v504, %v504
    %v530 = vadd.f32 %v522, %v523
    %531 = vadd.xlane.f32.xlu0 %v530
    %v532 = vpop.xlane.xlu0 %531
    %v533 = vadd.f32 %v524, %v525
    %534 = vadd.xlane.f32.xlu0 %v533
    %v535 = vpop.xlane.xlu0 %534
    %v536 = vadd.f32 %v526, %v527
    %537 = vadd.xlane.f32.xlu0 %v536
    %v538 = vpop.xlane.xlu0 %537
    %v539 = vadd.f32 %v528, %v529
    %540 = vadd.xlane.f32.xlu0 %v539
    %v541 = vpop.xlane.xlu0 %540
    %v542 = vadd.f32 %v532, %v535
    %v543 = vadd.f32 %v542, %v538
    %v544 = vadd.f32 %v543, %v541
    %v545 = vrot.slane %v544, 4
    %v546 = vadd.f32 %v544, %v545
    %v547 = vrot.slane %v546, 2
    %v548 = vadd.f32 %v546, %v547
    %v549 = vrot.slane %v548, 1
    %v550 = vadd.f32 %v548, %v549
    %vm551 = vcmp.eq.s32.totalorder %v195, 0
    %v552 = vsel %vm551, %v56, 0.0
    %vm553 = vcmp.eq.s32.totalorder %v195, 1
    %v554 = vsel %vm553, %v206, 0.0
    %v555 = vadd.f32 %v552, %v554
    %vm556 = vcmp.eq.s32.totalorder %v195, 2
    %v557 = vsel %vm556, %v521, 0.0
    %v558 = vadd.f32 %v555, %v557
    %vm559 = vcmp.eq.s32.totalorder %v195, 3
    %v560 = vsel %vm559, %v550, 0.0
    %v561 = vadd.f32 %v558, %v560
    %562 = vst [vmem:[#allocation6] sm:$0x1] %v561
    // Predicated region
    $region30: #{tpu_custom_call.1} parent=1 // pred_check
      _
    $region31: #{tpu_custom_call.1} parent=1 // pred_check_branch
      %564 = sbr.rel (0) target = $region33
    $region32: #{tpu_custom_call.1} parent=1 // pred_region
      %566 = vsyncadd [#allocation5], 0
      %s568 = sshll.u32 [#allocation6], 4
      %s569 = int_to_ptr.vmem [resolvable:$true] %s568
      %s570 = sshll.u32 %s6, 4
      %s571 = int_to_ptr.hbm [resolvable:$true] %s570
      %573 = dma.vmem_to_hbm [thread:$0]  %s569, 16, %s571, [#allocation5]
    $region33: #{tpu_custom_call.1} parent=1 // pred_fallthru
      _
    // Predicated region
    $region34: #{tpu_custom_call.1} parent=1 // pred_check
      _
    $region35: #{tpu_custom_call.1} parent=1 // pred_check_branch
      %575 = sbr.rel (0) target = $region37
    $region36: #{tpu_custom_call.1} parent=1 // pred_region
      %577 = dma.done [#allocation5], 16
    $region37: #{tpu_custom_call.1} parent=1 // pred_fallthru
      _
    %578 = vsyncpa [#allocation4], 1
    %579 = vsyncpa [#allocation5], 1

</llo_original>
